<compile_context>
chip_gen: v7x
topology: tpu7x:2x2x1
jax: 0.10.0
libtpu: 0.0.40
codegen_flags: <defaults>
</compile_context>

<pallas_src>
import functools

import jax
import jax.numpy as jnp
from jax.experimental import pallas as pl
from jax.experimental.pallas import tpu as pltpu


TILE_B_MAX = 512   # batch rows per grid step for large batches (MXU/HBM friendly M dim)


def _round_up(n: int, m: int) -> int:
    return ((n + m - 1) // m) * m


def _select_tile_b(batch: int) -> int:
    """Pick the batch tile. All returned values are multiples of 8 (sublane rule)."""
    b8 = _round_up(batch, 8)
    if b8 >= 2 * TILE_B_MAX:
        return TILE_B_MAX
    # Small batch: keep 2 grid steps when cheaply possible so the "parallel" batch axis
    # can be sharded across v7x's 2 TensorCores; costs one extra ~0.35us step on the
    # single-TC v5e/v6e chips, which is negligible.
    half = b8 // 2
    if half >= 8 and half % 8 == 0:
        return half
    return b8


def pants_kernel(x_ref, w_ref, b_ref, o_ref):
    # y = relu(x @ W + b); accumulate in f32, bias + ReLU in f32, cast at the end.
    acc = jnp.dot(x_ref[...], w_ref[...], preferred_element_type=jnp.float32)
    acc = acc + b_ref[...].astype(jnp.float32)
    o_ref[...] = jnp.maximum(acc, 0.0).astype(o_ref.dtype)


def prepare_params(weight, bias):
    """One-time parameter prep (do at init, NOT per forward call).

    weight : (out_features, in_features)  -- PyTorch nn.Linear layout
    bias   : (out_features,)
    returns w_t (in_features, out_features), bias_row (1, out_features)
    """
    w_t = jnp.asarray(weight).T
    bias_row = jnp.asarray(bias).reshape(1, -1)
    return w_t, bias_row


@jax.jit
def pants_ae_forward(x, w_t, bias_row):
    """Pallas forward of PantsAE.

    x        : (B, in_features)
    w_t      : (in_features, out_features)   -- prepared once by prepare_params
    bias_row : (1, out_features)
    returns (encoded, None) with encoded : (B, out_features)
    """
    B, fin = x.shape
    fin_w, fout = w_t.shape
    assert fin_w == fin, "weight/in_features mismatch"

    tile_b = _select_tile_b(B)
    b_p = _round_up(B, tile_b)

    # Only pad batch rows when B does not divide evenly; no K or N padding.
    x_in = x if b_p == B else jnp.zeros((b_p, fin), x.dtype).at[:B].set(x)

    grid = (b_p // tile_b,)

    itemsize = jnp.dtype(x.dtype).itemsize
    cost = pl.CostEstimate(
        flops=2 * b_p * fin * fout,
        transcendentals=0,
        bytes_accessed=(b_p * fin * itemsize                      # x
                        + fin * fout * jnp.dtype(w_t.dtype).itemsize   # W
                        + fout * jnp.dtype(bias_row.dtype).itemsize    # bias
                        + b_p * fout * itemsize),                  # out
    )

    out = pl.pallas_call(
        pants_kernel,
        out_shape=jax.ShapeDtypeStruct((b_p, fout), x.dtype),
        grid_spec=pltpu.PrefetchScalarGridSpec(
            num_scalar_prefetch=0,
            grid=grid,
            in_specs=[
                pl.BlockSpec((tile_b, fin), lambda i: (i, 0)),   # x: streamed over batch
                pl.BlockSpec((fin, fout), lambda i: (0, 0)),     # W: VMEM-resident
                pl.BlockSpec((1, fout), lambda i: (0, 0)),       # bias: VMEM-resident
            ],
            out_specs=pl.BlockSpec((tile_b, fout), lambda i: (i, 0)),
        ),
        compiler_params=pltpu.CompilerParams(
            dimension_semantics=("parallel",),   # batch axis shardable across v7x's 2 TCs
        ),
        cost_estimate=cost,
    )(x_in, w_t, bias_row)

    encoded = out if b_p == B else out[:B]
    return encoded, None


def reference(x, weight, bias):
    return jnp.maximum(x @ weight.T + bias, 0.0)


if __name__ == "__main__":
    # Small shapes consistent with the module: in_features=32, out_features=16.
    B, IN_FEATURES, OUT_FEATURES = 256, 32, 16

    key = jax.random.PRNGKey(0)
    kx, kw, kb = jax.random.split(key, 3)

    x = jax.random.normal(kx, (B, IN_FEATURES), dtype=jnp.float32)

    # PyTorch nn.Linear-style uniform init, deterministic.
    bound = 1.0 / (IN_FEATURES ** 0.5)
    weight = jax.random.uniform(kw, (OUT_FEATURES, IN_FEATURES),
                                minval=-bound, maxval=bound, dtype=jnp.float32)
    bias = jax.random.uniform(kb, (OUT_FEATURES,),
                              minval=-bound, maxval=bound, dtype=jnp.float32)

    # One-time parameter prep (transpose to matmul layout) — outside the per-call path.
    w_t, bias_row = prepare_params(weight, bias)

    encoded, aux = pants_ae_forward(x, w_t, bias_row)
    encoded = jax.block_until_ready(encoded)

    expected = reference(x, weight, bias)
    assert encoded.shape == (B, OUT_FEATURES)
    assert aux is None
    assert jnp.allclose(encoded, expected, atol=1e-5, rtol=1e-5)

    print("KERNEL_OK")
</pallas_src>

<mosaic_0001>
module attributes {stable_mosaic.version = 11 : i64} {
  func.func @pants_kernel(%arg0: i32, %arg1: memref<128x32xf32, #tpu.memory_space<vmem>>, %arg2: memref<32x16xf32, #tpu.memory_space<vmem>>, %arg3: memref<1x16xf32, #tpu.memory_space<vmem>>, %arg4: memref<128x16xf32, #tpu.memory_space<vmem>>) attributes {dimension_semantics = [#tpu.dimension_semantics<parallel>], iteration_bounds = array<i64: 2>, scalar_prefetch = 0 : i64, scratch_operands = 0 : i64, tpu.core_type = #tpu.core_type<tc>, window_params = [{transform_indices = @transform_0, window_bounds = array<i64: 128, 32>}, {pipeline_mode = #tpu.pipeline_mode<synchronous>, transform_indices = @transform_1, window_bounds = array<i64: 32, 16>}, {pipeline_mode = #tpu.pipeline_mode<synchronous>, transform_indices = @transform_2, window_bounds = array<i64: 1, 16>}, {transform_indices = @transform_3, window_bounds = array<i64: 128, 16>}]} {
    %c0 = arith.constant 0 : index
    %c0_0 = arith.constant 0 : index
    %0 = vector.load %arg1[%c0, %c0_0] : memref<128x32xf32, #tpu.memory_space<vmem>>, vector<128x32xf32>
    %c0_1 = arith.constant 0 : index
    %c0_2 = arith.constant 0 : index
    %1 = vector.load %arg2[%c0_1, %c0_2] : memref<32x16xf32, #tpu.memory_space<vmem>>, vector<32x16xf32>
    %cst = arith.constant dense<0.000000e+00> : vector<128x16xf32>
    %2 = tpu.matmul %0, %1, %cst {dimension_numbers = #tpu.dot_dimension_numbers<[1], [0], [0], [1], [0, 0, 1, 1], [], []>} : vector<128x32xf32>, vector<32x16xf32>, vector<128x16xf32> -> vector<128x16xf32>
    %c0_3 = arith.constant 0 : index
    %c0_4 = arith.constant 0 : index
    %3 = vector.load %arg3[%c0_3, %c0_4] : memref<1x16xf32, #tpu.memory_space<vmem>>, vector<1x16xf32>
    %4 = vector.broadcast %3 : vector<1x16xf32> to vector<128x16xf32>
    %5 = arith.addf %2, %4 : vector<128x16xf32>
    %cst_5 = arith.constant 0.000000e+00 : f32
    %6 = vector.broadcast %cst_5 : f32 to vector<128x16xf32>
    %7 = arith.maximumf %5, %6 : vector<128x16xf32>
    %c0_6 = arith.constant 0 : index
    %c0_7 = arith.constant 0 : index
    %8 = vector.load %arg4[%c0_6, %c0_7] : memref<128x16xf32, #tpu.memory_space<vmem>>, vector<128x16xf32>
    tpu.vector_store %arg4[%c0_6, %c0_7], %7 {strides = array<i32>} : memref<128x16xf32, #tpu.memory_space<vmem>>, vector<128x16xf32>,
    return
  }
  func.func @transform_0(%arg0: i32) -> (i32, i32) {
    %c0_i32 = arith.constant 0 : i32
    %c0_i32_0 = arith.constant 0 : i32
    return %arg0, %c0_i32 : i32, i32
  }
  func.func @transform_1(%arg0: i32) -> (i32, i32) {
    %c0_i32 = arith.constant 0 : i32
    %c0_i32_0 = arith.constant 0 : i32
    %c0_i32_1 = arith.constant 0 : i32
    return %c0_i32, %c0_i32_0 : i32, i32
  }
  func.func @transform_2(%arg0: i32) -> (i32, i32) {
    %c0_i32 = arith.constant 0 : i32
    %c0_i32_0 = arith.constant 0 : i32
    %c0_i32_1 = arith.constant 0 : i32
    return %c0_i32, %c0_i32_0 : i32, i32
  }
  func.func @transform_3(%arg0: i32) -> (i32, i32) {
    %c0_i32 = arith.constant 0 : i32
    %c0_i32_0 = arith.constant 0 : i32
    return %arg0, %c0_i32 : i32, i32
  }
}

</mosaic_0001>

<llo_original>
// kernel: pants_ae_forward.1
$region0: #{pants_ae_forward.1}
  #allocation0 [shape = 'u32[]', space=smem, size = 0x4, offset = 0x4, fixed_abs, tag = 'smem constant byte address 0x4 - core index']
  #allocation1 [shape = 'u32[144,128]{1,0:T(1,128)}', space=vmem, size = 0x12000, scoped, tag = 'internal scratch']
  %s0 = inlined_call_operand.vmem [shape: f32[256,32], index: 0, kind: input, shape index: {}]
  %s1 = inlined_call_operand.vmem [shape: f32[32,16], index: 1, kind: input, shape index: {}]
  %s2 = inlined_call_operand.vmem [shape: f32[1,16], index: 2, kind: input, shape index: {}]
  %s3 = inlined_call_operand.vmem [shape: f32[256,16], index: 3, kind: output, shape index: {}]
  %s4 = sld [smem:[#allocation0]]
  $region45: #{pants_ae_forward.1} parent=0
    _
  %s6 = ssub.s32 1, %s4
  %s7 = scalar_select 0, %s6, %s4
  loop: start=0, step=1, limit=4
  $region2: #{pants_ae_forward.1} parent=0 // loop_pre_header
    _
  $region3: #{pants_ae_forward.1} parent=0 // loop_header
    %s9 = sphi 0, %s13
    %p10 = scmp.ge.s32.totalorder %s9, 4
    %s19 = sphi 0, %s21
    %s22 = sphi 0, %s19
    %s23 = sphi 0, %s22
    %s39 = sphi 0, %s23
    %s43 = sphi 0, %s43
    %s45 = sphi 0, %s43
    %s46 = sphi 0, %s45
    %s60 = sphi 0, %s46
    %s64 = sphi 0, %s64
    %s66 = sphi 0, %s64
    %s67 = sphi 0, %s66
    %s81 = sphi 0, %s67
    %s87 = sphi 0, %s89
    %s90 = sphi 0, %s87
    %s91 = sphi 0, %s90
    %s107 = sphi 0, %s91
  $region4: #{pants_ae_forward.1} parent=0 // loop_header_branch
    %12 = sbr.rel (%p10) target = $region8
  $region5: #{pants_ae_forward.1} parent=0 // loop_body
    %s14 = ssub.s32 %s9, 1
    %s15 = ssub.s32 %s9, 2
    %s16 = sadd.s32 %s9, 1
    %s17 = ssub.s32 %s9, %s16
    %p18 = scmp.eq.s32.totalorder %s17, 0
    %s20 = sadd.s32 %s19, 1
    %s21 = scalar_select %p18, %s19, %s20
    %p24 = pneg %p18
    %p25 = scmp.eq.s32.totalorder %s9, 1
    %p26 = por %p24, %p25
    %p27 = scmp.ne.s32.totalorder %s19, %s22
    %p28 = scmp.eq.s32.totalorder %s9, 0
    %p29 = por %p27, %p28
    %p30 = scmp.ne.s32.totalorder %s19, %s22
    %p31 = scmp.eq.s32.totalorder %s14, 1
    %p32 = por %p30, %p31
    %p33 = scmp.ne.s32.totalorder %s22, %s23
    %p34 = scmp.eq.s32.totalorder %s14, 0
    %p35 = por %p33, %p34
    %p36 = scmp.ne.s32.totalorder %s22, %s23
    %p37 = scmp.eq.s32.totalorder %s15, 1
    %p38 = por %p36, %p37
    %p40 = scmp.ne.s32.totalorder %s23, %s39
    %p41 = scmp.eq.s32.totalorder %s15, 0
    %p42 = por %p40, %p41
    %s44 = sadd.s32 %s43, 1
    %p47 = scmp.eq.s32.totalorder %s9, 1
    %p48 = scmp.ne.s32.totalorder %s43, %s45
    %p49 = scmp.eq.s32.totalorder %s9, 0
    %p50 = por %p48, %p49
    %p51 = scmp.ne.s32.totalorder %s43, %s45
    %p52 = scmp.eq.s32.totalorder %s14, 1
    %p53 = por %p51, %p52
    %p54 = scmp.ne.s32.totalorder %s45, %s46
    %p55 = scmp.eq.s32.totalorder %s14, 0
    %p56 = por %p54, %p55
    %p57 = scmp.ne.s32.totalorder %s45, %s46
    %p58 = scmp.eq.s32.totalorder %s15, 1
    %p59 = por %p57, %p58
    %p61 = scmp.ne.s32.totalorder %s46, %s60
    %p62 = scmp.eq.s32.totalorder %s15, 0
    %p63 = por %p61, %p62
    %s65 = sadd.s32 %s64, 1
    %p68 = scmp.eq.s32.totalorder %s9, 1
    %p69 = scmp.ne.s32.totalorder %s64, %s66
    %p70 = scmp.eq.s32.totalorder %s9, 0
    %p71 = por %p69, %p70
    %p72 = scmp.ne.s32.totalorder %s64, %s66
    %p73 = scmp.eq.s32.totalorder %s14, 1
    %p74 = por %p72, %p73
    %p75 = scmp.ne.s32.totalorder %s66, %s67
    %p76 = scmp.eq.s32.totalorder %s14, 0
    %p77 = por %p75, %p76
    %p78 = scmp.ne.s32.totalorder %s66, %s67
    %p79 = scmp.eq.s32.totalorder %s15, 1
    %p80 = por %p78, %p79
    %p82 = scmp.ne.s32.totalorder %s67, %s81
    %p83 = scmp.eq.s32.totalorder %s15, 0
    %p84 = por %p82, %p83
    %s85 = ssub.s32 %s9, %s16
    %p86 = scmp.eq.s32.totalorder %s85, 0
    %s88 = sadd.s32 %s87, 1
    %s89 = scalar_select %p86, %s87, %s88
    %p92 = pneg %p86
    %p93 = scmp.eq.s32.totalorder %s9, 1
    %p94 = por %p92, %p93
    %p95 = scmp.ne.s32.totalorder %s87, %s90
    %p96 = scmp.eq.s32.totalorder %s9, 0
    %p97 = por %p95, %p96
    %p98 = scmp.ne.s32.totalorder %s87, %s90
    %p99 = scmp.eq.s32.totalorder %s14, 1
    %p100 = por %p98, %p99
    %p101 = scmp.ne.s32.totalorder %s90, %s91
    %p102 = scmp.eq.s32.totalorder %s14, 0
    %p103 = por %p101, %p102
    %p104 = scmp.ne.s32.totalorder %s90, %s91
    %p105 = scmp.eq.s32.totalorder %s15, 1
    %p106 = por %p104, %p105
    %p108 = scmp.ne.s32.totalorder %s91, %s107
    %p109 = scmp.eq.s32.totalorder %s15, 0
    %p110 = por %p108, %p109
    %p111 = scmp.le.s32.totalorder 1, %s9
    %p112 = scmp.lt.s32.totalorder %s9, 3
    %p113 = pnand %p111, %p112
    %p114 = pneg %p113
    // Predicated region
    $region9: #{pants_ae_forward.1} parent=5 // pred_check
      _
    $region10: #{pants_ae_forward.1} parent=5 // pred_check_branch
      %116 = sbr.rel (%p113) target = $region12
    $region11: #{pants_ae_forward.1} parent=5 // pred_region
      %s117 = ssub.s32 %s9, 1
      // Predicated region
      $region13: #{pants_ae_forward.1} parent=11 // pred_check
        %p118 = pneg %p56
      $region14: #{pants_ae_forward.1} parent=11 // pred_check_branch
        %120 = sbr.rel (%p118) target = $region16
      $region15: #{pants_ae_forward.1} parent=11 // pred_region
        _
      $region16: #{pants_ae_forward.1} parent=11 // pred_fallthru
        _
      // Predicated region
      $region17: #{pants_ae_forward.1} parent=11 // pred_check
        %p121 = pneg %p77
      $region18: #{pants_ae_forward.1} parent=11 // pred_check_branch
        %123 = sbr.rel (%p121) target = $region20
      $region19: #{pants_ae_forward.1} parent=11 // pred_region
        _
      $region20: #{pants_ae_forward.1} parent=11 // pred_fallthru
        _
    $region12: #{pants_ae_forward.1} parent=5 // pred_fallthru
      _
    %p124 = scmp.lt.s32.totalorder %s9, 2
    // Predicated region
    $region21: #{pants_ae_forward.1} parent=5 // pred_check
      %p125 = pneg %p124
    $region22: #{pants_ae_forward.1} parent=5 // pred_check_branch
      %127 = sbr.rel (%p125) target = $region24
    $region23: #{pants_ae_forward.1} parent=5 // pred_region
      // Predicated region
      $region25: #{pants_ae_forward.1} parent=23 // pred_check
        %p128 = pneg %p29
      $region26: #{pants_ae_forward.1} parent=23 // pred_check_branch
        %130 = sbr.rel (%p128) target = $region28
      $region27: #{pants_ae_forward.1} parent=23 // pred_region
        %s131 = smul.u32 16, %s9
        %p132 = scmp.lt.s32.totalorder %s131, 31
        %s133 = scalar_select %p132, %s131, 31
        %s134 = smul.addr %s133, 8
        %s135 = scalar_lea.vmem %s0, %s134
        %s136 = smul.u32 16, %s9
      $region28: #{pants_ae_forward.1} parent=23 // pred_fallthru
        _
    $region24: #{pants_ae_forward.1} parent=5 // pred_fallthru
      _
    %p137 = scmp.le.s32.totalorder 1, %s9
    %p138 = scmp.lt.s32.totalorder %s9, 3
    %p139 = pnand %p137, %p138
    %p140 = pneg %p139
    // Predicated region
    $region29: #{pants_ae_forward.1} parent=5 // pred_check
      _
    $region30: #{pants_ae_forward.1} parent=5 // pred_check_branch
      %142 = sbr.rel (%p139) target = $region32
    $region31: #{pants_ae_forward.1} parent=5 // pred_region
      %s143 = ssub.s32 %s9, 1
      %s144 = smul.u32 16, %s14
      %p145 = scmp.lt.s32.totalorder %s144, 31
      %s146 = scalar_select %p145, %s144, 31
      %s147 = smul.addr %s146, 8
      %s148 = scalar_lea.vmem %s0, %s147
      %p149 = pneg %p35
      %p150 = pneg %p32
      %p151 = pneg %p56
      %p152 = pneg %p53
      %p153 = pneg %p77
      %p154 = pneg %p74
      %p155 = pneg %p103
      %p156 = pneg %p100
      %s157 = smul.u32 16, %s14
      %p158 = scmp.lt.s32.totalorder %s157, 31
      %s159 = scalar_select %p158, %s157, 31
      %s160 = smul.addr %s159, 8
      %s161 = scalar_lea.vmem %s3, %s160
      %s162 = smul.u32 16, %s14
      %p163 = scmp.lt.s32.totalorder %s162, 31
      %s164 = scalar_select %p163, %s162, 31
      %s165 = smul.addr %s164, 8
      %s166 = scalar_lea.vmem %s0, %s165
      %s167 = smul.u32 16, %s14
      %s168 = smul.u32 16, %s14
      %p169 = scmp.lt.s32.totalorder %s168, 31
      %s170 = scalar_select %p169, %s168, 31
      %s171 = smul.addr %s170, 8
      %s172 = scalar_lea.vmem %s3, %s171
      %s173 = smul.u32 16, %s14
      %v174 = vld [vmem:[%s166] sm:$0xff]
      %v175 = vld [vmem:[%s166 + $0x8] sm:$0xff]
      %v176 = vld [vmem:[%s166 + $0x10] sm:$0xff]
      %v177 = vld [vmem:[%s166 + $0x18] sm:$0xff]
      %v178 = vld [vmem:[%s166 + $0x20] sm:$0xff]
      %v179 = vld [vmem:[%s166 + $0x28] sm:$0xff]
      %v180 = vld [vmem:[%s166 + $0x30] sm:$0xff]
      %v181 = vld [vmem:[%s166 + $0x38] sm:$0xff]
      %v182 = vld [vmem:[%s166 + $0x40] sm:$0xff]
      %v183 = vld [vmem:[%s166 + $0x48] sm:$0xff]
      %v184 = vld [vmem:[%s166 + $0x50] sm:$0xff]
      %v185 = vld [vmem:[%s166 + $0x58] sm:$0xff]
      %v186 = vld [vmem:[%s166 + $0x60] sm:$0xff]
      %v187 = vld [vmem:[%s166 + $0x68] sm:$0xff]
      %v188 = vld [vmem:[%s166 + $0x70] sm:$0xff]
      %v189 = vld [vmem:[%s166 + $0x78] sm:$0xff]
      %v190 = vld [vmem:[%s1] sm:$0xff]
      %v191 = vld [vmem:[%s1 + $0x8] sm:$0xff]
      %v192 = vld [vmem:[%s1 + $0x10] sm:$0xff]
      %v193 = vld [vmem:[%s1 + $0x18] sm:$0xff]
      %v194 = vld [vmem:[%s2] sm:$0x1]
      %v196 = vlaneseq
      %v197 = vshrl.u32 %v196, 7
      %v198 = vsub.s32 0, %v197
      %v199 = vrot.slane %v194, %v198
      %vm201 = vcmask 261120
      %v203 = vsel %vm201, %v174, 0
      %v206 = vsel %vm201, %v175, 0
      %v209 = vsel %vm201, %v176, 0
      %v212 = vsel %vm201, %v177, 0
      %v215 = vsel %vm201, %v178, 0
      %v218 = vsel %vm201, %v179, 0
      %v221 = vsel %vm201, %v180, 0
      %v224 = vsel %vm201, %v181, 0
      %v227 = vsel %vm201, %v182, 0
      %v230 = vsel %vm201, %v183, 0
      %v233 = vsel %vm201, %v184, 0
      %v236 = vsel %vm201, %v185, 0
      %v239 = vsel %vm201, %v186, 0
      %v242 = vsel %vm201, %v187, 0
      %v245 = vsel %vm201, %v188, 0
      %v248 = vsel %vm201, %v189, 0
      %250 = vmatprep.subr.mxu0 0.0
      %251 = vmatpush1.msra.mxu0 %v190
      %252 = vmatprep.subr.mxu0 0.0
      %253 = vmatpush1.msra.mxu0 %v191
      %254 = vmatprep.subr.mxu0 0.0
      %255 = vmatpush1.msra.mxu0 %v192
      %256 = vmatprep.subr.mxu0 0.0
      %257 = vmatpush1.msra.mxu0 %v193
      %258 = vmatprep.subr.mxu0 0.0
      %259 = vmatpush1.msra.mxu0 0.0
      %260 = vmatprep.subr.mxu0 0.0
      %261 = vmatpush1.msra.mxu0 0.0
      %262 = vmatprep.subr.mxu0 0.0
      %263 = vmatpush1.msra.mxu0 0.0
      %264 = vmatprep.subr.mxu0 0.0
      %265 = vmatpush1.msra.mxu0 0.0
      %266 = vmatprep.subr.mxu0 0.0
      %267 = vmatpush1.msra.mxu0 0.0
      %268 = vmatprep.subr.mxu0 0.0
      %269 = vmatpush1.msra.mxu0 0.0
      %270 = vmatprep.subr.mxu0 0.0
      %271 = vmatpush1.msra.mxu0 0.0
      %272 = vmatprep.subr.mxu0 0.0
      %273 = vmatpush1.msra.mxu0 0.0
      %274 = vmatprep.subr.mxu0 0.0
      %275 = vmatpush1.msra.mxu0 0.0
      %276 = vmatprep.subr.mxu0 0.0
      %277 = vmatpush1.msra.mxu0 0.0
      %278 = vmatprep.subr.mxu0 0.0
      %279 = vmatpush1.msra.mxu0 0.0
      %280 = vmatprep.subr.mxu0 0.0
      %281 = vmatpush1.msra.mxu0 0.0
      %282 = vmatprep.subr.mxu0 0.0
      %283 = vmatpush1.msra.mxu0 0.0
      %284 = vmatprep.subr.mxu0 0.0
      %285 = vmatpush1.msra.mxu0 0.0
      %286 = vmatprep.subr.mxu0 0.0
      %287 = vmatpush1.msra.mxu0 0.0
      %288 = vmatprep.subr.mxu0 0.0
      %289 = vmatpush1.msra.mxu0 0.0
      %290 = vmatprep.subr.mxu0 0.0
      %291 = vmatpush1.msra.mxu0 0.0
      %292 = vmatprep.subr.mxu0 0.0
      %293 = vmatpush1.msra.mxu0 0.0
      %294 = vmatprep.subr.mxu0 0.0
      %295 = vmatpush1.msra.mxu0 0.0
      %296 = vmatprep.subr.mxu0 0.0
      %297 = vmatpush1.msra.mxu0 0.0
      %298 = vmatprep.subr.mxu0 0.0
      %299 = vmatpush1.msra.mxu0 0.0
      %300 = vmatprep.subr.mxu0 0.0
      %301 = vmatpush1.msra.mxu0 0.0
      %302 = vmatprep.subr.mxu0 0.0
      %303 = vmatpush1.msra.mxu0 0.0
      %304 = vmatprep.subr.mxu0 0.0
      %305 = vmatpush1.msra.mxu0 0.0
      %306 = vmatprep.subr.mxu0 0.0
      %307 = vmatpush1.msra.mxu0 0.0
      %308 = vmatprep.subr.mxu0 0.0
      %309 = vmatpush1.msra.mxu0 0.0
      %310 = vmatprep.subr.mxu0 0.0
      %311 = vmatpush1.msra.mxu0 0.0
      %312 = vmatprep.subr.mxu0 0.0
      %313 = vmatpush1.msra.mxu0 0.0
      %314 = vmatprep.mubr.f32.mxu0 0.0
      %315 = vmatmul.mubr.f32.gmra.mrb[0].mxu0 %v203
      %v316 = vpop.f32.mrb[0].mxu0
      %v317 = vadd.f32 %v199, %v316
      %v318 = vpop.f32.mrb[0].mxu0
      %319 = vmatprep.mubr.f32.mxu0 0.0
      %320 = vmatmul.mubr.f32.gmra.mrb[0].mxu0 %v206
      %v321 = vpop.f32.mrb[0].mxu0
      %v322 = vadd.f32 %v199, %v321
      %v323 = vpop.f32.mrb[0].mxu0
      %324 = vmatprep.mubr.f32.mxu0 0.0
      %325 = vmatmul.mubr.f32.gmra.mrb[0].mxu0 %v209
      %v326 = vpop.f32.mrb[0].mxu0
      %v327 = vadd.f32 %v199, %v326
      %v328 = vpop.f32.mrb[0].mxu0
      %329 = vmatprep.mubr.f32.mxu0 0.0
      %330 = vmatmul.mubr.f32.gmra.mrb[0].mxu0 %v212
      %v331 = vpop.f32.mrb[0].mxu0
      %v332 = vadd.f32 %v199, %v331
      %v333 = vpop.f32.mrb[0].mxu0
      %334 = vmatprep.mubr.f32.mxu0 0.0
      %335 = vmatmul.mubr.f32.gmra.mrb[0].mxu0 %v215
      %v336 = vpop.f32.mrb[0].mxu0
      %v337 = vadd.f32 %v199, %v336
      %v338 = vpop.f32.mrb[0].mxu0
      %339 = vmatprep.mubr.f32.mxu0 0.0
      %340 = vmatmul.mubr.f32.gmra.mrb[0].mxu0 %v218
      %v341 = vpop.f32.mrb[0].mxu0
      %v342 = vadd.f32 %v199, %v341
      %v343 = vpop.f32.mrb[0].mxu0
      %344 = vmatprep.mubr.f32.mxu0 0.0
      %345 = vmatmul.mubr.f32.gmra.mrb[0].mxu0 %v221
      %v346 = vpop.f32.mrb[0].mxu0
      %v347 = vadd.f32 %v199, %v346
      %v348 = vpop.f32.mrb[0].mxu0
      %349 = vmatprep.mubr.f32.mxu0 0.0
      %350 = vmatmul.mubr.f32.gmra.mrb[0].mxu0 %v224
      %v351 = vpop.f32.mrb[0].mxu0
      %v352 = vadd.f32 %v199, %v351
      %v353 = vpop.f32.mrb[0].mxu0
      %354 = vmatprep.mubr.f32.mxu0 0.0
      %355 = vmatmul.mubr.f32.gmra.mrb[0].mxu0 %v227
      %v356 = vpop.f32.mrb[0].mxu0
      %v357 = vadd.f32 %v199, %v356
      %v358 = vpop.f32.mrb[0].mxu0
      %359 = vmatprep.mubr.f32.mxu0 0.0
      %360 = vmatmul.mubr.f32.gmra.mrb[0].mxu0 %v230
      %v361 = vpop.f32.mrb[0].mxu0
      %v362 = vadd.f32 %v199, %v361
      %v363 = vpop.f32.mrb[0].mxu0
      %364 = vmatprep.mubr.f32.mxu0 0.0
      %365 = vmatmul.mubr.f32.gmra.mrb[0].mxu0 %v233
      %v366 = vpop.f32.mrb[0].mxu0
      %v367 = vadd.f32 %v199, %v366
      %v368 = vpop.f32.mrb[0].mxu0
      %369 = vmatprep.mubr.f32.mxu0 0.0
      %370 = vmatmul.mubr.f32.gmra.mrb[0].mxu0 %v236
      %v371 = vpop.f32.mrb[0].mxu0
      %v372 = vadd.f32 %v199, %v371
      %v373 = vpop.f32.mrb[0].mxu0
      %374 = vmatprep.mubr.f32.mxu0 0.0
      %375 = vmatmul.mubr.f32.gmra.mrb[0].mxu0 %v239
      %v376 = vpop.f32.mrb[0].mxu0
      %v377 = vadd.f32 %v199, %v376
      %v378 = vpop.f32.mrb[0].mxu0
      %379 = vmatprep.mubr.f32.mxu0 0.0
      %380 = vmatmul.mubr.f32.gmra.mrb[0].mxu0 %v242
      %v381 = vpop.f32.mrb[0].mxu0
      %v382 = vadd.f32 %v199, %v381
      %v383 = vpop.f32.mrb[0].mxu0
      %384 = vmatprep.mubr.f32.mxu0 0.0
      %385 = vmatmul.mubr.f32.gmra.mrb[0].mxu0 %v245
      %v386 = vpop.f32.mrb[0].mxu0
      %v387 = vadd.f32 %v199, %v386
      %v388 = vpop.f32.mrb[0].mxu0
      %389 = vmatprep.mubr.f32.mxu0 0.0
      %390 = vmatmul.mubr.f32.gmra.mrb[0].mxu0 %v248
      %v391 = vpop.f32.mrb[0].mxu0
      %v392 = vadd.f32 %v199, %v391
      %v393 = vpop.f32.mrb[0].mxu0
      %394 = vdwg.mxu0
      %v395 = vmax.f32 %v317, 0.0
      %v396 = vmax.f32 %v322, 0.0
      %v397 = vmax.f32 %v327, 0.0
      %v398 = vmax.f32 %v332, 0.0
      %v399 = vmax.f32 %v337, 0.0
      %v400 = vmax.f32 %v342, 0.0
      %v401 = vmax.f32 %v347, 0.0
      %v402 = vmax.f32 %v352, 0.0
      %v403 = vmax.f32 %v357, 0.0
      %v404 = vmax.f32 %v362, 0.0
      %v405 = vmax.f32 %v367, 0.0
      %v406 = vmax.f32 %v372, 0.0
      %v407 = vmax.f32 %v377, 0.0
      %v408 = vmax.f32 %v382, 0.0
      %v409 = vmax.f32 %v387, 0.0
      %v410 = vmax.f32 %v392, 0.0
      %vm411 = vcmask 130048
      %412 = vst.msk [vmem:[%s172] sm:$0xff] %vm411, %v395
      %413 = vst.msk [vmem:[%s172 + $0x8] sm:$0xff] %vm411, %v396
      %414 = vst.msk [vmem:[%s172 + $0x10] sm:$0xff] %vm411, %v397
      %415 = vst.msk [vmem:[%s172 + $0x18] sm:$0xff] %vm411, %v398
      %416 = vst.msk [vmem:[%s172 + $0x20] sm:$0xff] %vm411, %v399
      %417 = vst.msk [vmem:[%s172 + $0x28] sm:$0xff] %vm411, %v400
      %418 = vst.msk [vmem:[%s172 + $0x30] sm:$0xff] %vm411, %v401
      %419 = vst.msk [vmem:[%s172 + $0x38] sm:$0xff] %vm411, %v402
      %420 = vst.msk [vmem:[%s172 + $0x40] sm:$0xff] %vm411, %v403
      %421 = vst.msk [vmem:[%s172 + $0x48] sm:$0xff] %vm411, %v404
      %422 = vst.msk [vmem:[%s172 + $0x50] sm:$0xff] %vm411, %v405
      %423 = vst.msk [vmem:[%s172 + $0x58] sm:$0xff] %vm411, %v406
      %424 = vst.msk [vmem:[%s172 + $0x60] sm:$0xff] %vm411, %v407
      %425 = vst.msk [vmem:[%s172 + $0x68] sm:$0xff] %vm411, %v408
      %426 = vst.msk [vmem:[%s172 + $0x70] sm:$0xff] %vm411, %v409
      %427 = vst.msk [vmem:[%s172 + $0x78] sm:$0xff] %vm411, %v410
      %s428 = smul.u32 16, %s14
      %p429 = scmp.lt.s32.totalorder %s428, 31
      %s430 = scalar_select %p429, %s428, 31
      %s431 = smul.addr %s430, 8
      %s432 = scalar_lea.vmem %s3, %s431
      // Predicated region
      $region33: #{pants_ae_forward.1} parent=31 // pred_check
        %p433 = pneg %p100
      $region34: #{pants_ae_forward.1} parent=31 // pred_check_branch
        %435 = sbr.rel (%p433) target = $region36
      $region35: #{pants_ae_forward.1} parent=31 // pred_region
        %s436 = smul.u32 16, %s14
      $region36: #{pants_ae_forward.1} parent=31 // pred_fallthru
        _
    $region32: #{pants_ae_forward.1} parent=5 // pred_fallthru
      _
    %p437 = scmp.le.s32.totalorder 2, %s9
    // Predicated region
    $region37: #{pants_ae_forward.1} parent=5 // pred_check
      %p438 = pneg %p437
    $region38: #{pants_ae_forward.1} parent=5 // pred_check_branch
      %440 = sbr.rel (%p438) target = $region40
    $region39: #{pants_ae_forward.1} parent=5 // pred_region
      %s441 = ssub.s32 %s9, 2
      // Predicated region
      $region41: #{pants_ae_forward.1} parent=39 // pred_check
        %p442 = pneg %p106
      $region42: #{pants_ae_forward.1} parent=39 // pred_check_branch
        %444 = sbr.rel (%p442) target = $region44
      $region43: #{pants_ae_forward.1} parent=39 // pred_region
        %s445 = smul.u32 16, %s15
        %p446 = scmp.lt.s32.totalorder %s445, 31
        %s447 = scalar_select %p446, %s445, 31
        %s448 = smul.addr %s447, 8
        %s449 = scalar_lea.vmem %s3, %s448
      $region44: #{pants_ae_forward.1} parent=39 // pred_fallthru
        _
    $region40: #{pants_ae_forward.1} parent=5 // pred_fallthru
      _
  $region6: #{pants_ae_forward.1} parent=0 // loop_footer
    %s13 = sadd.s32 1, %s9
  $region7: #{pants_ae_forward.1} parent=0 // loop_footer_branch
    %8 = sbr.rel target = $region3
  $region8: #{pants_ae_forward.1} parent=0 // loop_exit
    _

</llo_original>
